<compile_context>
chip_gen: v7x
topology: tpu7x:2x2x1
jax: 0.10.0
libtpu: 0.0.40
codegen_flags: <defaults>
</compile_context>

<pallas_src>
import numpy as np
import jax
import jax.numpy as jnp
from jax.experimental import pallas as pl
from jax.experimental.pallas import tpu as pltpu


def _make_convblock_kernel(N, H, W, Cin, Cout, eps):
    WC = W * Cin              # lanes per kh tap
    K = 3 * WC                # im2col contraction size (kw folded into the weights)
    R = N * H                 # rows of the output slab
    inv_cnt = 1.0 / float(N * H * W)

    def _rowsum8(v):
        # (R, W*Cout) -> (8, W*Cout): partial row sums over 8-row (sublane) groups.
        s = v[0:8]
        for r in range(8, R, 8):
            s = s + v[r:r + 8]
        return s

    def kernel(x_ref, w_ref, pool_ref, g_ref, b_ref, alpha_ref, o_ref, col_ref):
        # x_ref:     (N, H, W*Cin)       NHWC input, (w, ci) flattened into lanes
        # w_ref:     (3*W*Cin, W*Cout)   banded conv weights (kw + DepthToSpace folded)
        # pool_ref:  (W*Cout, W*Cout)    per-channel pooling matrix (permuted lanes)
        # g_ref/b_ref: (1, W*Cout)       BN gamma/beta tiled onto the permuted lanes
        # alpha_ref: (1,) in SMEM        PReLU slope (scalar path)
        # o_ref:     (N*H, W*Cout)       lane-dense slab, pixel-shuffle lane order
        # col_ref:   (N, H, 3*W*Cin)     scratch: 3 row-shifted copies of x

        # ---- im2col over kh only; 'same' padding = the two zeroed border rows ----
        col_ref[:, 0:1, 0:WC] = jnp.zeros((N, 1, WC), jnp.float32)              # top pad
        col_ref[:, 1:H, 0:WC] = x_ref[:, 0:H - 1, :]                            # x[n, h-1]
        col_ref[:, :, WC:2 * WC] = x_ref[...]                                   # x[n, h  ]
        col_ref[:, 0:H - 1, 2 * WC:3 * WC] = x_ref[:, 1:H, :]                   # x[n, h+1]
        col_ref[:, H - 1:H, 2 * WC:3 * WC] = jnp.zeros((N, 1, WC), jnp.float32) # bottom pad

        patches = col_ref[...].reshape(R, K)       # leading-dim merge only (free)

        # ---- 3x3 conv as ONE matmul (bias dropped: cancels under train-mode BN) ----
        acc = jnp.dot(patches, w_ref[...],
                      preferred_element_type=jnp.float32)            # (N*H, W*Cout)

        # ---- BatchNorm with batch statistics (two-pass: exact mean, centered var) --
        pool = pool_ref[...]
        s1p = _rowsum8(acc)                                          # (8, W*Cout)
        mean = jnp.sum(jnp.dot(s1p, pool, preferred_element_type=jnp.float32),
                       axis=0, keepdims=True) * inv_cnt              # (1, W*Cout)
        d = acc - mean                                               # exactly centered
        s2p = _rowsum8(d * d)                                        # (8, W*Cout)
        var = jnp.sum(jnp.dot(s2p, pool, preferred_element_type=jnp.float32),
                      axis=0, keepdims=True) * inv_cnt               # biased batch var
        scale = g_ref[...] * jax.lax.rsqrt(var + eps)
        y = d * scale + b_ref[...]                                   # single FMA pass

        # ---- PReLU (single shared slope, scalar read from SMEM) ----
        a = alpha_ref[0]
        o_ref[...] = jnp.where(y > 0.0, y, a * y)                    # lane-dense store

    return kernel


def make_convblock_forward(w_oihw, bias, gamma, beta, alpha, *, N, H, W,
                           block_size=2, eps=0.01):
    """Precomputes all kernel constants once (host-side numpy) and returns a jitted
    forward(x_nchw).  x_nchw: (N, Cin, H, W) f32 -> (N, Cout//bs^2, H*bs, W*bs)."""
    del bias  # per-channel conv bias cancels exactly under train-mode BatchNorm
    bs = block_size
    w_np = np.asarray(jax.device_get(w_oihw), np.float32)       # (Cout, Cin, 3, 3)
    Cout, Cin = int(w_np.shape[0]), int(w_np.shape[1])
    assert Cout % (bs * bs) == 0
    assert (N * H) % 8 == 0          # partial-row reduction assumes 8-row groups
    c_out = Cout // (bs * bs)
    WC, WCo, K = W * Cin, W * Cout, 3 * W * Cin

    # --- banded conv weight: kw shifts folded into a block-banded matrix over W,
    #     so the kernel only im2cols over kh (K = 3*W*Cin). ---
    w_big = np.zeros((K, WCo), np.float32)
    for kh in range(3):
        for kw in range(3):
            tap = w_np[:, :, kh, kw].T                           # (Cin, Cout)
            for wd in range(W):
                ws = wd + kw - 1
                if 0 <= ws < W:
                    w_big[kh * WC + ws * Cin:kh * WC + (ws + 1) * Cin,
                          wd * Cout:(wd + 1) * Cout] = tap

    # --- DepthToSpace folded into the output lane order: columns permuted from
    #     (w, bs_h, bs_w, c_out) to (bs_h, w, bs_w, c_out) so the kernel slab is
    #     already pixel-shuffled and the wrapper reduces to a pure reshape. ---
    perm = (np.arange(WCo).reshape(W, bs, bs, c_out)
            .transpose(1, 0, 2, 3).reshape(-1))
    w_big = w_big[:, perm]
    chan = np.tile(np.arange(Cout), W)[perm]                     # channel id per lane
    pool = (chan[:, None] == chan[None, :]).astype(np.float32)   # (WCo, WCo)
    gamma_l = np.tile(np.asarray(jax.device_get(gamma), np.float32), W)[perm][None, :]
    beta_l = np.tile(np.asarray(jax.device_get(beta), np.float32), W)[perm][None, :]
    alpha_s = np.asarray([alpha], np.float32)                    # (1,) scalar -> SMEM

    consts = (jnp.asarray(w_big), jnp.asarray(pool), jnp.asarray(gamma_l),
              jnp.asarray(beta_l), jnp.asarray(alpha_s))

    kernel = _make_convblock_kernel(N, H, W, Cin, Cout, eps)
    vmem = pl.BlockSpec(memory_space=pltpu.MemorySpace.VMEM)
    smem = pl.BlockSpec(memory_space=pltpu.MemorySpace.SMEM)

    # NOTE: no grid — the whole problem (~10 KiB in / 8 KiB out, ~0.1 MiB VMEM
    # footprint) fits in a sliver of VMEM and the BN batch statistics are global,
    # so a single invocation avoids per-step pipeline overhead.
    # TODO(synk): for large N*H*W, switch to a two-pass tiled grid (conv + per-tile
    # sum/sumsq, then normalize+PReLU) with dimension_semantics=("parallel",);
    # re-derive the tile budget against v7x's 64 MiB VMEM and use >=128 output lanes.
    conv_call = pl.pallas_call(
        kernel,
        out_shape=jax.ShapeDtypeStruct((N * H, WCo), jnp.float32),
        in_specs=[vmem, vmem, vmem, vmem, vmem, smem],
        out_specs=vmem,
        scratch_shapes=[pltpu.VMEM((N, H, K), jnp.float32)],     # im2col slab
    )

    @jax.jit
    def forward(x_nchw):
        # tiny layout glue: NCHW -> (N, H, W*Cin), (w, ci) flattened into lanes
        x_flat = (jnp.transpose(x_nchw, (0, 2, 3, 1))
                  .reshape(N, H, WC).astype(jnp.float32))
        y = conv_call(x_flat, *consts)                           # (N*H, W*Cout)
        # DepthToSpace already folded into the lane order: pure reshapes only.
        y = y.reshape(N, H * bs, W * bs, c_out)
        if c_out == 1:
            return y.reshape(N, 1, H * bs, W * bs)
        return jnp.transpose(y, (0, 3, 1, 2))                    # only if Cout > bs*bs

    return forward


def _reference(x_nchw, w_oihw, bias, gamma, beta, alpha, block_size=2, eps=0.01):
    """Pure-JAX reference mirroring the PyTorch forward (training-mode BN,
    TF-style DepthToSpace channel split (bs_h, bs_w, c_out))."""
    y = jax.lax.conv_general_dilated(
        x_nchw, w_oihw, window_strides=(1, 1), padding="SAME",
        dimension_numbers=("NCHW", "OIHW", "NCHW"))
    y = y + bias.reshape(1, -1, 1, 1)
    mean = jnp.mean(y, axis=(0, 2, 3), keepdims=True)
    var = jnp.mean((y - mean) ** 2, axis=(0, 2, 3), keepdims=True)
    y = (y - mean) * jax.lax.rsqrt(var + eps)
    y = gamma.reshape(1, -1, 1, 1) * y + beta.reshape(1, -1, 1, 1)
    y = jnp.where(y > 0, y, alpha * y)
    N, C, H, W = y.shape
    bs = block_size
    y = y.reshape(N, bs, bs, C // (bs * bs), H, W)
    y = jnp.transpose(y, (0, 3, 4, 1, 5, 2))
    return y.reshape(N, C // (bs * bs), H * bs, W * bs)


if __name__ == "__main__":
    key = jax.random.PRNGKey(0)
    kx, kw = jax.random.split(key)

    N, C, H, W = 2, 4, 16, 16  # in_channel = 4 (divisible by 4 for DepthToSpace)
    x = jax.random.normal(kx, (N, C, H, W), jnp.float32)

    # Parameters matching the PyTorch __init__:
    # conv1.weight: xavier_uniform_, conv1.bias: zeros, BN affine defaults, PReLU(init=0)
    fan_in = fan_out = C * 9
    bound = (6.0 / (fan_in + fan_out)) ** 0.5
    w = jax.random.uniform(kw, (C, C, 3, 3), jnp.float32, -bound, bound)
    b = jnp.zeros((C,), jnp.float32)
    gamma = jnp.ones((C,), jnp.float32)
    beta = jnp.zeros((C,), jnp.float32)
    alpha = 0.0

    forward = make_convblock_forward(w, b, gamma, beta, alpha, N=N, H=H, W=W)
    out = jax.block_until_ready(forward(x))

    ref = _reference(x, w, b, gamma, beta, alpha)
    assert out.shape == (N, C // 4, 2 * H, 2 * W), out.shape
    assert jnp.allclose(out, ref, atol=2e-4, rtol=2e-4), float(
        jnp.max(jnp.abs(out - ref)))

    print("KERNEL_OK")
</pallas_src>

<mosaic_0001>
module attributes {stable_mosaic.version = 11 : i64} {
  func.func @kernel(%arg0: memref<2x16x64xf32, #tpu.memory_space<vmem>>, %arg1: memref<192x64xf32, #tpu.memory_space<vmem>>, %arg2: memref<64x64xf32, #tpu.memory_space<vmem>>, %arg3: memref<1x64xf32, #tpu.memory_space<vmem>>, %arg4: memref<1x64xf32, #tpu.memory_space<vmem>>, %arg5: memref<1xf32, #tpu.memory_space<smem>>, %arg6: memref<32x64xf32, #tpu.memory_space<vmem>>, %arg7: memref<2x16x192xf32, #tpu.memory_space<vmem>>) attributes {dimension_semantics = [], scalar_prefetch = 0 : i64, scratch_operands = 1 : i64, tpu.core_type = #tpu.core_type<tc>} {
    %cst = arith.constant 0.000000e+00 : f32
    %0 = vector.broadcast %cst : f32 to vector<2x1x64xf32>
    %c0 = arith.constant 0 : index
    %c0_0 = arith.constant 0 : index
    %c0_1 = arith.constant 0 : index
    %1 = vector.load %arg7[%c0, %c0_0, %c0_1] : memref<2x16x192xf32, #tpu.memory_space<vmem>>, vector<2x1x64xf32>
    tpu.vector_store %arg7[%c0, %c0_0, %c0_1], %0 {strides = array<i32>} : memref<2x16x192xf32, #tpu.memory_space<vmem>>, vector<2x1x64xf32>,
    %c0_2 = arith.constant 0 : index
    %c0_3 = arith.constant 0 : index
    %c0_4 = arith.constant 0 : index
    %2 = vector.load %arg0[%c0_2, %c0_3, %c0_4] : memref<2x16x64xf32, #tpu.memory_space<vmem>>, vector<2x15x64xf32>
    %c0_5 = arith.constant 0 : index
    %c1 = arith.constant 1 : index
    %c0_6 = arith.constant 0 : index
    %3 = vector.load %arg7[%c0_5, %c1, %c0_6] : memref<2x16x192xf32, #tpu.memory_space<vmem>>, vector<2x15x64xf32>
    tpu.vector_store %arg7[%c0_5, %c1, %c0_6], %2 {strides = array<i32>} : memref<2x16x192xf32, #tpu.memory_space<vmem>>, vector<2x15x64xf32>,
    %c0_7 = arith.constant 0 : index
    %c0_8 = arith.constant 0 : index
    %c0_9 = arith.constant 0 : index
    %4 = vector.load %arg0[%c0_7, %c0_8, %c0_9] : memref<2x16x64xf32, #tpu.memory_space<vmem>>, vector<2x16x64xf32>
    %c0_10 = arith.constant 0 : index
    %c0_11 = arith.constant 0 : index
    %c64 = arith.constant 64 : index
    %5 = vector.load %arg7[%c0_10, %c0_11, %c64] : memref<2x16x192xf32, #tpu.memory_space<vmem>>, vector<2x16x64xf32>
    tpu.vector_store %arg7[%c0_10, %c0_11, %c64], %4 {strides = array<i32>} : memref<2x16x192xf32, #tpu.memory_space<vmem>>, vector<2x16x64xf32>,
    %c0_12 = arith.constant 0 : index
    %c1_13 = arith.constant 1 : index
    %c0_14 = arith.constant 0 : index
    %6 = vector.load %arg0[%c0_12, %c1_13, %c0_14] : memref<2x16x64xf32, #tpu.memory_space<vmem>>, vector<2x15x64xf32>
    %c0_15 = arith.constant 0 : index
    %c0_16 = arith.constant 0 : index
    %c128 = arith.constant 128 : index
    %7 = vector.load %arg7[%c0_15, %c0_16, %c128] : memref<2x16x192xf32, #tpu.memory_space<vmem>>, vector<2x15x64xf32>
    tpu.vector_store %arg7[%c0_15, %c0_16, %c128], %6 {strides = array<i32>} : memref<2x16x192xf32, #tpu.memory_space<vmem>>, vector<2x15x64xf32>,
    %cst_17 = arith.constant 0.000000e+00 : f32
    %8 = vector.broadcast %cst_17 : f32 to vector<2x1x64xf32>
    %c0_18 = arith.constant 0 : index
    %c15 = arith.constant 15 : index
    %c128_19 = arith.constant 128 : index
    %9 = vector.load %arg7[%c0_18, %c15, %c128_19] : memref<2x16x192xf32, #tpu.memory_space<vmem>>, vector<2x1x64xf32>
    tpu.vector_store %arg7[%c0_18, %c15, %c128_19], %8 {strides = array<i32>} : memref<2x16x192xf32, #tpu.memory_space<vmem>>, vector<2x1x64xf32>,
    %c0_20 = arith.constant 0 : index
    %c0_21 = arith.constant 0 : index
    %c0_22 = arith.constant 0 : index
    %10 = vector.load %arg7[%c0_20, %c0_21, %c0_22] : memref<2x16x192xf32, #tpu.memory_space<vmem>>, vector<2x16x192xf32>
    %11 = vector.shape_cast %10 : vector<2x16x192xf32> to vector<32x192xf32>
    %c0_23 = arith.constant 0 : index
    %c0_24 = arith.constant 0 : index
    %12 = vector.load %arg1[%c0_23, %c0_24] : memref<192x64xf32, #tpu.memory_space<vmem>>, vector<192x64xf32>
    %cst_25 = arith.constant dense<0.000000e+00> : vector<32x64xf32>
    %13 = tpu.matmul %11, %12, %cst_25 {dimension_numbers = #tpu.dot_dimension_numbers<[1], [0], [0], [1], [0, 0, 1, 1], [], []>} : vector<32x192xf32>, vector<192x64xf32>, vector<32x64xf32> -> vector<32x64xf32>
    %c0_26 = arith.constant 0 : index
    %c0_27 = arith.constant 0 : index
    %14 = vector.load %arg2[%c0_26, %c0_27] : memref<64x64xf32, #tpu.memory_space<vmem>>, vector<64x64xf32>
    %15 = vector.extract_strided_slice %13 {offsets = [0, 0], sizes = [8, 64], strides = [1, 1]} : vector<32x64xf32> to vector<8x64xf32>
    %16 = vector.extract_strided_slice %13 {offsets = [8, 0], sizes = [8, 64], strides = [1, 1]} : vector<32x64xf32> to vector<8x64xf32>
    %17 = arith.addf %15, %16 : vector<8x64xf32>
    %18 = vector.extract_strided_slice %13 {offsets = [16, 0], sizes = [8, 64], strides = [1, 1]} : vector<32x64xf32> to vector<8x64xf32>
    %19 = arith.addf %17, %18 : vector<8x64xf32>
    %20 = vector.extract_strided_slice %13 {offsets = [24, 0], sizes = [8, 64], strides = [1, 1]} : vector<32x64xf32> to vector<8x64xf32>
    %21 = arith.addf %19, %20 : vector<8x64xf32>
    %cst_28 = arith.constant dense<0.000000e+00> : vector<8x64xf32>
    %22 = tpu.matmul %21, %14, %cst_28 {dimension_numbers = #tpu.dot_dimension_numbers<[1], [0], [0], [1], [0, 0, 1, 1], [], []>} : vector<8x64xf32>, vector<64x64xf32>, vector<8x64xf32> -> vector<8x64xf32>
    %cst_29 = arith.constant dense<0.000000e+00> : vector<64xf32>
    %23 = vector.multi_reduction <add>, %22, %cst_29 [0] : vector<8x64xf32> to vector<64xf32>
    %24 = vector.shape_cast %23 : vector<64xf32> to vector<1x64xf32>
    %cst_30 = arith.constant 0.001953125 : f32
    %25 = vector.broadcast %cst_30 : f32 to vector<1x64xf32>
    %26 = arith.mulf %24, %25 : vector<1x64xf32>
    %27 = vector.broadcast %26 : vector<1x64xf32> to vector<32x64xf32>
    %28 = arith.subf %13, %27 : vector<32x64xf32>
    %29 = arith.mulf %28, %28 : vector<32x64xf32>
    %30 = vector.extract_strided_slice %29 {offsets = [0, 0], sizes = [8, 64], strides = [1, 1]} : vector<32x64xf32> to vector<8x64xf32>
    %31 = vector.extract_strided_slice %29 {offsets = [8, 0], sizes = [8, 64], strides = [1, 1]} : vector<32x64xf32> to vector<8x64xf32>
    %32 = arith.addf %30, %31 : vector<8x64xf32>
    %33 = vector.extract_strided_slice %29 {offsets = [16, 0], sizes = [8, 64], strides = [1, 1]} : vector<32x64xf32> to vector<8x64xf32>
    %34 = arith.addf %32, %33 : vector<8x64xf32>
    %35 = vector.extract_strided_slice %29 {offsets = [24, 0], sizes = [8, 64], strides = [1, 1]} : vector<32x64xf32> to vector<8x64xf32>
    %36 = arith.addf %34, %35 : vector<8x64xf32>
    %cst_31 = arith.constant dense<0.000000e+00> : vector<8x64xf32>
    %37 = tpu.matmul %36, %14, %cst_31 {dimension_numbers = #tpu.dot_dimension_numbers<[1], [0], [0], [1], [0, 0, 1, 1], [], []>} : vector<8x64xf32>, vector<64x64xf32>, vector<8x64xf32> -> vector<8x64xf32>
    %cst_32 = arith.constant dense<0.000000e+00> : vector<64xf32>
    %38 = vector.multi_reduction <add>, %37, %cst_32 [0] : vector<8x64xf32> to vector<64xf32>
    %39 = vector.shape_cast %38 : vector<64xf32> to vector<1x64xf32>
    %cst_33 = arith.constant 0.001953125 : f32
    %40 = vector.broadcast %cst_33 : f32 to vector<1x64xf32>
    %41 = arith.mulf %39, %40 : vector<1x64xf32>
    %c0_34 = arith.constant 0 : index
    %c0_35 = arith.constant 0 : index
    %42 = vector.load %arg3[%c0_34, %c0_35] : memref<1x64xf32, #tpu.memory_space<vmem>>, vector<1x64xf32>
    %cst_36 = arith.constant 0.00999999977 : f32
    %43 = vector.broadcast %cst_36 : f32 to vector<1x64xf32>
    %44 = arith.addf %41, %43 : vector<1x64xf32>
    %45 = math.rsqrt %44 : vector<1x64xf32>
    %46 = arith.mulf %42, %45 : vector<1x64xf32>
    %47 = vector.broadcast %46 : vector<1x64xf32> to vector<32x64xf32>
    %48 = arith.mulf %28, %47 : vector<32x64xf32>
    %c0_37 = arith.constant 0 : index
    %c0_38 = arith.constant 0 : index
    %49 = vector.load %arg4[%c0_37, %c0_38] : memref<1x64xf32, #tpu.memory_space<vmem>>, vector<1x64xf32>
    %50 = vector.broadcast %49 : vector<1x64xf32> to vector<32x64xf32>
    %51 = arith.addf %48, %50 : vector<32x64xf32>
    %c0_39 = arith.constant 0 : index
    %52 = memref.load %arg5[%c0_39] : memref<1xf32, #tpu.memory_space<smem>>
    %cst_40 = arith.constant 0.000000e+00 : f32
    %53 = vector.broadcast %cst_40 : f32 to vector<32x64xf32>
    %54 = arith.cmpf ogt, %51, %53 : vector<32x64xf32>
    %55 = vector.broadcast %52 : f32 to vector<32x64xf32>
    %56 = arith.mulf %55, %51 : vector<32x64xf32>
    %57 = arith.select %54, %51, %56 : vector<32x64xi1>, vector<32x64xf32>
    %c0_41 = arith.constant 0 : index
    %c0_42 = arith.constant 0 : index
    %58 = vector.load %arg6[%c0_41, %c0_42] : memref<32x64xf32, #tpu.memory_space<vmem>>, vector<32x64xf32>
    tpu.vector_store %arg6[%c0_41, %c0_42], %57 {strides = array<i32>} : memref<32x64xf32, #tpu.memory_space<vmem>>, vector<32x64xf32>,
    return
  }
}

</mosaic_0001>

<llo_original>
// kernel: forward.1
$region0: #{forward.1}
  #allocation0 [shape = 'u32[]', space=smem, size = 0x4, offset = 0x4, fixed_abs, tag = 'smem constant byte address 0x4 - core index']
  #allocation1 [shape = 'u32[144,128]{1,0:T(1,128)}', space=vmem, size = 0x12000, scoped, tag = 'internal scratch']
  #allocation2 [shape = 'f32[2,16,192]{2,1,0:T(8,128)}', space=vmem, size = 0x8000, scoped, tag = 'scratch operand']
  #allocation3 [shape = 'f32[1]{0:T(128)S(6)}', space=smem, size = 0x200, scoped, tag = 'scoped memory for forward.1']
  %s0 = inlined_call_operand.vmem [shape: f32[2,16,64], index: 0, kind: input, shape index: {}]
  %s1 = inlined_call_operand.vmem [shape: f32[192,64], index: 1, kind: input, shape index: {}]
  %s2 = inlined_call_operand.vmem [shape: f32[64,64], index: 2, kind: input, shape index: {}]
  %s3 = inlined_call_operand.vmem [shape: f32[1,64], index: 3, kind: input, shape index: {}]
  %s4 = inlined_call_operand.vmem [shape: f32[1,64], index: 4, kind: input, shape index: {}]
  %s5 = inlined_call_operand.<no memory space> [shape: f32[1], index: 5, kind: input, shape index: {}]
  %s6 = inlined_call_operand.vmem [shape: f32[32,64], index: 6, kind: output, shape index: {}]
  %s7 = sld [smem:[#allocation0]]
  $region34: #{forward.1} parent=0
    _
  %s9 = ssub.s32 1, %s7
  %s10 = scalar_select 0, %s9, %s7
  %11 = sst [smem:[#allocation3]] %s5
  // Predicated region
  $region2: #{forward.1} parent=0 // pred_check
    _
  $region3: #{forward.1} parent=0 // pred_check_branch
    %13 = sbr.rel (0) target = $region5
  $region4: #{forward.1} parent=0 // pred_region
    _
  $region5: #{forward.1} parent=0 // pred_fallthru
    _
  // Predicated region
  $region6: #{forward.1} parent=0 // pred_check
    _
  $region7: #{forward.1} parent=0 // pred_check_branch
    %15 = sbr.rel (0) target = $region9
  $region8: #{forward.1} parent=0 // pred_region
    _
  $region9: #{forward.1} parent=0 // pred_fallthru
    _
  // Predicated region
  $region10: #{forward.1} parent=0 // pred_check
    _
  $region11: #{forward.1} parent=0 // pred_check_branch
    %17 = sbr.rel (0) target = $region13
  $region12: #{forward.1} parent=0 // pred_region
    _
  $region13: #{forward.1} parent=0 // pred_fallthru
    _
  // Predicated region
  $region14: #{forward.1} parent=0 // pred_check
    _
  $region15: #{forward.1} parent=0 // pred_check_branch
    %19 = sbr.rel (0) target = $region17
  $region16: #{forward.1} parent=0 // pred_region
    _
  $region17: #{forward.1} parent=0 // pred_fallthru
    _
  // Predicated region
  $region18: #{forward.1} parent=0 // pred_check
    _
  $region19: #{forward.1} parent=0 // pred_check_branch
    %21 = sbr.rel (0) target = $region21
  $region20: #{forward.1} parent=0 // pred_region
    _
  $region21: #{forward.1} parent=0 // pred_fallthru
    _
  // Predicated region
  $region22: #{forward.1} parent=0 // pred_check
    _
  $region23: #{forward.1} parent=0 // pred_check_branch
    %23 = sbr.rel (0) target = $region25
  $region24: #{forward.1} parent=0 // pred_region
    _
  $region25: #{forward.1} parent=0 // pred_fallthru
    _
  %vm24 = vcmask 516096
  %25 = vst.msk [vmem:[#allocation2] sm:$0x1] %vm24, 0.0
  %26 = vst.msk [vmem:[#allocation2 + $0x20] sm:$0x1] %vm24, 0.0
  %v27 = vld [vmem:[%s0] sm:$0xff]
  %v28 = vld [vmem:[%s0 + $0x8] sm:$0x7f]
  %v29 = vld [vmem:[%s0 + $0x10] sm:$0xff]
  %v30 = vld [vmem:[%s0 + $0x18] sm:$0x7f]
  %vm35 = vcmask 1040384
  %v36 = vrot.slane %v27, 7
  %v37 = vrot.slane %v28, 7
  %v38 = vsel %vm35, %v36, %v37
  %v39 = vrot.slane %v29, 7
  %v40 = vrot.slane %v30, 7
  %v41 = vsel %vm35, %v39, %v40
  %vm46 = vcmask 523265
  %47 = vst.msk [vmem:[#allocation2] sm:$0xfe] %vm46, %v36
  %vm48 = vcmask 523264
  %49 = vst.msk [vmem:[#allocation2 + $0x10] sm:$0xff] %vm48, %v38
  %50 = vst.msk [vmem:[#allocation2 + $0x20] sm:$0xfe] %vm46, %v39
  %51 = vst.msk [vmem:[#allocation2 + $0x30] sm:$0xff] %vm48, %v41
  %v52 = vld [vmem:[%s0] sm:$0xff]
  %v53 = vld [vmem:[%s0 + $0x8] sm:$0xff]
  %v54 = vld [vmem:[%s0 + $0x10] sm:$0xff]
  %v55 = vld [vmem:[%s0 + $0x18] sm:$0xff]
  %60 = vrot.lane.b32.xlu0 %v52, 64
  %v61 = vpop.permute.xlu0 %60
  %62 = vrot.lane.b32.xlu0 %v53, 64
  %v63 = vpop.permute.xlu0 %62
  %64 = vrot.lane.b32.xlu0 %v54, 64
  %v65 = vpop.permute.xlu0 %64
  %66 = vrot.lane.b32.xlu0 %v55, 64
  %v67 = vpop.permute.xlu0 %66
  %vm72 = vcmask 1048064
  %73 = vst.msk [vmem:[#allocation2] sm:$0xff] %vm72, %v61
  %74 = vst.msk [vmem:[#allocation2 + $0x10] sm:$0xff] %vm72, %v63
  %75 = vst.msk [vmem:[#allocation2 + $0x20] sm:$0xff] %vm72, %v65
  %76 = vst.msk [vmem:[#allocation2 + $0x30] sm:$0xff] %vm72, %v67
  %v77 = vld [vmem:[%s0 + $0x1] sm:$0xff]
  %v78 = vld [vmem:[%s0 + $0x9] sm:$0x7f]
  %v79 = vld [vmem:[%s0 + $0x11] sm:$0xff]
  %v80 = vld [vmem:[%s0 + $0x19] sm:$0x7f]
  %81 = vst.msk [vmem:[#allocation2 + $0x8] sm:$0xff] %vm48, %v77
  %vm82 = vcmask 522240
  %83 = vst.msk [vmem:[#allocation2 + $0x18] sm:$0x7f] %vm82, %v78
  %84 = vst.msk [vmem:[#allocation2 + $0x28] sm:$0xff] %vm48, %v79
  %85 = vst.msk [vmem:[#allocation2 + $0x38] sm:$0x7f] %vm82, %v80
  %86 = vst.msk [vmem:[#allocation2 + $0x1f] sm:$0x1] %vm24, 0.0
  %87 = vst.msk [vmem:[#allocation2 + $0x3f] sm:$0x1] %vm24, 0.0
  %v88 = vld [vmem:[#allocation2] sm:$0xff]
  %v89 = vld [vmem:[#allocation2 + $0x8] sm:$0xff]
  %v90 = vld [vmem:[#allocation2 + $0x10] sm:$0xff]
  %v91 = vld [vmem:[#allocation2 + $0x18] sm:$0xff]
  %v92 = vld [vmem:[#allocation2 + $0x20] sm:$0xff]
  %v93 = vld [vmem:[#allocation2 + $0x28] sm:$0xff]
  %v94 = vld [vmem:[#allocation2 + $0x30] sm:$0xff]
  %v95 = vld [vmem:[#allocation2 + $0x38] sm:$0xff]
  %v96 = vld [vmem:[%s1] sm:$0xff]
  %v97 = vld [vmem:[%s1 + $0x8] sm:$0xff]
  %v98 = vld [vmem:[%s1 + $0x10] sm:$0xff]
  %v99 = vld [vmem:[%s1 + $0x18] sm:$0xff]
  %v100 = vld [vmem:[%s1 + $0x20] sm:$0xff]
  %v101 = vld [vmem:[%s1 + $0x28] sm:$0xff]
  %v102 = vld [vmem:[%s1 + $0x30] sm:$0xff]
  %v103 = vld [vmem:[%s1 + $0x38] sm:$0xff]
  %v104 = vld [vmem:[%s1 + $0x40] sm:$0xff]
  %v105 = vld [vmem:[%s1 + $0x48] sm:$0xff]
  %v106 = vld [vmem:[%s1 + $0x50] sm:$0xff]
  %v107 = vld [vmem:[%s1 + $0x58] sm:$0xff]
  %v108 = vld [vmem:[%s1 + $0x60] sm:$0xff]
  %v109 = vld [vmem:[%s1 + $0x68] sm:$0xff]
  %v110 = vld [vmem:[%s1 + $0x70] sm:$0xff]
  %v111 = vld [vmem:[%s1 + $0x78] sm:$0xff]
  %v112 = vld [vmem:[%s1 + $0x80] sm:$0xff]
  %v113 = vld [vmem:[%s1 + $0x88] sm:$0xff]
  %v114 = vld [vmem:[%s1 + $0x90] sm:$0xff]
  %v115 = vld [vmem:[%s1 + $0x98] sm:$0xff]
  %v116 = vld [vmem:[%s1 + $0xa0] sm:$0xff]
  %v117 = vld [vmem:[%s1 + $0xa8] sm:$0xff]
  %v118 = vld [vmem:[%s1 + $0xb0] sm:$0xff]
  %v119 = vld [vmem:[%s1 + $0xb8] sm:$0xff]
  %v121 = vsel %vm48, %v89, 0
  %v124 = vsel %vm48, %v91, 0
  %v127 = vsel %vm48, %v93, 0
  %v130 = vsel %vm48, %v95, 0
  %132 = vmatprep.subr.mxu0 0.0
  %133 = vmatpush1.msra.mxu0 %v96
  %134 = vmatprep.subr.mxu0 0.0
  %135 = vmatpush1.msra.mxu0 %v97
  %136 = vmatprep.subr.mxu0 0.0
  %137 = vmatpush1.msra.mxu0 %v98
  %138 = vmatprep.subr.mxu0 0.0
  %139 = vmatpush1.msra.mxu0 %v99
  %140 = vmatprep.subr.mxu0 0.0
  %141 = vmatpush1.msra.mxu0 %v100
  %142 = vmatprep.subr.mxu0 0.0
  %143 = vmatpush1.msra.mxu0 %v101
  %144 = vmatprep.subr.mxu0 0.0
  %145 = vmatpush1.msra.mxu0 %v102
  %146 = vmatprep.subr.mxu0 0.0
  %147 = vmatpush1.msra.mxu0 %v103
  %148 = vmatprep.subr.mxu0 0.0
  %149 = vmatpush1.msra.mxu0 %v104
  %150 = vmatprep.subr.mxu0 0.0
  %151 = vmatpush1.msra.mxu0 %v105
  %152 = vmatprep.subr.mxu0 0.0
  %153 = vmatpush1.msra.mxu0 %v106
  %154 = vmatprep.subr.mxu0 0.0
  %155 = vmatpush1.msra.mxu0 %v107
  %156 = vmatprep.subr.mxu0 0.0
  %157 = vmatpush1.msra.mxu0 %v108
  %158 = vmatprep.subr.mxu0 0.0
  %159 = vmatpush1.msra.mxu0 %v109
  %160 = vmatprep.subr.mxu0 0.0
  %161 = vmatpush1.msra.mxu0 %v110
  %162 = vmatprep.subr.mxu0 0.0
  %163 = vmatpush1.msra.mxu0 %v111
  %164 = vmatprep.subr.mxu0 0.0
  %165 = vmatpush1.msra.mxu0 %v112
  %166 = vmatprep.subr.mxu0 0.0
  %167 = vmatpush1.msra.mxu0 %v113
  %168 = vmatprep.subr.mxu0 0.0
  %169 = vmatpush1.msra.mxu0 %v114
  %170 = vmatprep.subr.mxu0 0.0
  %171 = vmatpush1.msra.mxu0 %v115
  %172 = vmatprep.subr.mxu0 0.0
  %173 = vmatpush1.msra.mxu0 %v116
  %174 = vmatprep.subr.mxu0 0.0
  %175 = vmatpush1.msra.mxu0 %v117
  %176 = vmatprep.subr.mxu0 0.0
  %177 = vmatpush1.msra.mxu0 %v118
  %178 = vmatprep.subr.mxu0 0.0
  %179 = vmatpush1.msra.mxu0 %v119
  %180 = vmatprep.subr.mxu0 0.0
  %181 = vmatpush1.msra.mxu0 0.0
  %182 = vmatprep.subr.mxu0 0.0
  %183 = vmatpush1.msra.mxu0 0.0
  %184 = vmatprep.subr.mxu0 0.0
  %185 = vmatpush1.msra.mxu0 0.0
  %186 = vmatprep.subr.mxu0 0.0
  %187 = vmatpush1.msra.mxu0 0.0
  %188 = vmatprep.subr.mxu0 0.0
  %189 = vmatpush1.msra.mxu0 0.0
  %190 = vmatprep.subr.mxu0 0.0
  %191 = vmatpush1.msra.mxu0 0.0
  %192 = vmatprep.subr.mxu0 0.0
  %193 = vmatpush1.msra.mxu0 0.0
  %194 = vmatprep.subr.mxu0 0.0
  %195 = vmatpush1.msra.mxu0 0.0
  %196 = vmatprep.mubr.f32.mxu0 %v121
  %197 = vmatmul.mubr.f32.gmra.mrb[0].mxu0 %v88
  %v198 = vpop.f32.mrb[0].mxu0
  %v199 = vadd.f32 0.0, %v198
  %v200 = vpop.f32.mrb[0].mxu0
  %201 = vmatprep.mubr.f32.mxu0 %v124
  %202 = vmatmul.mubr.f32.gmra.mrb[0].mxu0 %v90
  %v203 = vpop.f32.mrb[0].mxu0
  %v204 = vadd.f32 0.0, %v203
  %v205 = vpop.f32.mrb[0].mxu0
  %206 = vmatprep.mubr.f32.mxu0 %v127
  %207 = vmatmul.mubr.f32.gmra.mrb[0].mxu0 %v92
  %v208 = vpop.f32.mrb[0].mxu0
  %v209 = vadd.f32 0.0, %v208
  %v210 = vpop.f32.mrb[0].mxu0
  %211 = vmatprep.mubr.f32.mxu0 %v130
  %212 = vmatmul.mubr.f32.gmra.mrb[0].mxu0 %v94
  %v213 = vpop.f32.mrb[0].mxu0
  %v214 = vadd.f32 0.0, %v213
  %v215 = vpop.f32.mrb[0].mxu0
  %216 = vdwg.mxu0
  %v217 = vld [vmem:[%s2] sm:$0xff]
  %v218 = vld [vmem:[%s2 + $0x8] sm:$0xff]
  %v219 = vld [vmem:[%s2 + $0x10] sm:$0xff]
  %v220 = vld [vmem:[%s2 + $0x18] sm:$0xff]
  %v221 = vld [vmem:[%s2 + $0x20] sm:$0xff]
  %v222 = vld [vmem:[%s2 + $0x28] sm:$0xff]
  %v223 = vld [vmem:[%s2 + $0x30] sm:$0xff]
  %v224 = vld [vmem:[%s2 + $0x38] sm:$0xff]
  %v225 = vadd.f32 %v199, %v204
  %v226 = vadd.f32 %v225, %v209
  %v227 = vadd.f32 %v226, %v214
  %v229 = vsel %vm48, %v227, 0
  %231 = vmatprep.subr.mxu0 0.0
  %232 = vmatpush1.msra.mxu0 %v217
  %233 = vmatprep.subr.mxu0 0.0
  %234 = vmatpush1.msra.mxu0 %v218
  %235 = vmatprep.subr.mxu0 0.0
  %236 = vmatpush1.msra.mxu0 %v219
  %237 = vmatprep.subr.mxu0 0.0
  %238 = vmatpush1.msra.mxu0 %v220
  %239 = vmatprep.subr.mxu0 0.0
  %240 = vmatpush1.msra.mxu0 %v221
  %241 = vmatprep.subr.mxu0 0.0
  %242 = vmatpush1.msra.mxu0 %v222
  %243 = vmatprep.subr.mxu0 0.0
  %244 = vmatpush1.msra.mxu0 %v223
  %245 = vmatprep.subr.mxu0 0.0
  %246 = vmatpush1.msra.mxu0 %v224
  %247 = vmatprep.subr.mxu0 0.0
  %248 = vmatpush1.msra.mxu0 0.0
  %249 = vmatprep.subr.mxu0 0.0
  %250 = vmatpush1.msra.mxu0 0.0
  %251 = vmatprep.subr.mxu0 0.0
  %252 = vmatpush1.msra.mxu0 0.0
  %253 = vmatprep.subr.mxu0 0.0
  %254 = vmatpush1.msra.mxu0 0.0
  %255 = vmatprep.subr.mxu0 0.0
  %256 = vmatpush1.msra.mxu0 0.0
  %257 = vmatprep.subr.mxu0 0.0
  %258 = vmatpush1.msra.mxu0 0.0
  %259 = vmatprep.subr.mxu0 0.0
  %260 = vmatpush1.msra.mxu0 0.0
  %261 = vmatprep.subr.mxu0 0.0
  %262 = vmatpush1.msra.mxu0 0.0
  %263 = vmatprep.subr.mxu0 0.0
  %264 = vmatpush1.msra.mxu0 0.0
  %265 = vmatprep.subr.mxu0 0.0
  %266 = vmatpush1.msra.mxu0 0.0
  %267 = vmatprep.subr.mxu0 0.0
  %268 = vmatpush1.msra.mxu0 0.0
  %269 = vmatprep.subr.mxu0 0.0
  %270 = vmatpush1.msra.mxu0 0.0
  %271 = vmatprep.subr.mxu0 0.0
  %272 = vmatpush1.msra.mxu0 0.0
  %273 = vmatprep.subr.mxu0 0.0
  %274 = vmatpush1.msra.mxu0 0.0
  %275 = vmatprep.subr.mxu0 0.0
  %276 = vmatpush1.msra.mxu0 0.0
  %277 = vmatprep.subr.mxu0 0.0
  %278 = vmatpush1.msra.mxu0 0.0
  %279 = vmatprep.subr.mxu0 0.0
  %280 = vmatpush1.msra.mxu0 0.0
  %281 = vmatprep.subr.mxu0 0.0
  %282 = vmatpush1.msra.mxu0 0.0
  %283 = vmatprep.subr.mxu0 0.0
  %284 = vmatpush1.msra.mxu0 0.0
  %285 = vmatprep.subr.mxu0 0.0
  %286 = vmatpush1.msra.mxu0 0.0
  %287 = vmatprep.subr.mxu0 0.0
  %288 = vmatpush1.msra.mxu0 0.0
  %289 = vmatprep.subr.mxu0 0.0
  %290 = vmatpush1.msra.mxu0 0.0
  %291 = vmatprep.subr.mxu0 0.0
  %292 = vmatpush1.msra.mxu0 0.0
  %293 = vmatprep.subr.mxu0 0.0
  %294 = vmatpush1.msra.mxu0 0.0
  %295 = vmatprep.mubr.f32.mxu0 0.0
  %296 = vmatmul.mubr.f32.gmra.mrb[0].mxu0 %v229
  %v297 = vpop.f32.mrb[0].mxu0
  %v298 = vadd.f32 0.0, %v297
  %v299 = vpop.f32.mrb[0].mxu0
  %300 = vdwg.mxu0
  %v301 = vsel %vm48, %v298, 0.0
  %v302 = vrot.slane %v301, 4
  %v303 = vadd.f32 %v301, %v302
  %v304 = vrot.slane %v303, 2
  %v305 = vadd.f32 %v303, %v304
  %v306 = vrot.slane %v305, 1
  %v307 = vadd.f32 %v305, %v306
  %v308 = vmul.f32 %v307, 0.001953125
  %v309 = vsub.f32 %v199, %v308
  %v310 = vsub.f32 %v204, %v308
  %v311 = vsub.f32 %v209, %v308
  %v312 = vsub.f32 %v214, %v308
  %v313 = vmul.f32 %v309, %v309
  %v314 = vmul.f32 %v310, %v310
  %v315 = vmul.f32 %v311, %v311
  %v316 = vmul.f32 %v312, %v312
  %v317 = vadd.f32 %v313, %v314
  %v318 = vadd.f32 %v317, %v315
  %v319 = vadd.f32 %v318, %v316
  %v321 = vsel %vm48, %v319, 0
  %323 = vmatprep.subr.mxu0 0.0
  %324 = vmatpush1.msra.mxu0 %v217
  %325 = vmatprep.subr.mxu0 0.0
  %326 = vmatpush1.msra.mxu0 %v218
  %327 = vmatprep.subr.mxu0 0.0
  %328 = vmatpush1.msra.mxu0 %v219
  %329 = vmatprep.subr.mxu0 0.0
  %330 = vmatpush1.msra.mxu0 %v220
  %331 = vmatprep.subr.mxu0 0.0
  %332 = vmatpush1.msra.mxu0 %v221
  %333 = vmatprep.subr.mxu0 0.0
  %334 = vmatpush1.msra.mxu0 %v222
  %335 = vmatprep.subr.mxu0 0.0
  %336 = vmatpush1.msra.mxu0 %v223
  %337 = vmatprep.subr.mxu0 0.0
  %338 = vmatpush1.msra.mxu0 %v224
  %339 = vmatprep.subr.mxu0 0.0
  %340 = vmatpush1.msra.mxu0 0.0
  %341 = vmatprep.subr.mxu0 0.0
  %342 = vmatpush1.msra.mxu0 0.0
  %343 = vmatprep.subr.mxu0 0.0
  %344 = vmatpush1.msra.mxu0 0.0
  %345 = vmatprep.subr.mxu0 0.0
  %346 = vmatpush1.msra.mxu0 0.0
  %347 = vmatprep.subr.mxu0 0.0
  %348 = vmatpush1.msra.mxu0 0.0
  %349 = vmatprep.subr.mxu0 0.0
  %350 = vmatpush1.msra.mxu0 0.0
  %351 = vmatprep.subr.mxu0 0.0
  %352 = vmatpush1.msra.mxu0 0.0
  %353 = vmatprep.subr.mxu0 0.0
  %354 = vmatpush1.msra.mxu0 0.0
  %355 = vmatprep.subr.mxu0 0.0
  %356 = vmatpush1.msra.mxu0 0.0
  %357 = vmatprep.subr.mxu0 0.0
  %358 = vmatpush1.msra.mxu0 0.0
  %359 = vmatprep.subr.mxu0 0.0
  %360 = vmatpush1.msra.mxu0 0.0
  %361 = vmatprep.subr.mxu0 0.0
  %362 = vmatpush1.msra.mxu0 0.0
  %363 = vmatprep.subr.mxu0 0.0
  %364 = vmatpush1.msra.mxu0 0.0
  %365 = vmatprep.subr.mxu0 0.0
  %366 = vmatpush1.msra.mxu0 0.0
  %367 = vmatprep.subr.mxu0 0.0
  %368 = vmatpush1.msra.mxu0 0.0
  %369 = vmatprep.subr.mxu0 0.0
  %370 = vmatpush1.msra.mxu0 0.0
  %371 = vmatprep.subr.mxu0 0.0
  %372 = vmatpush1.msra.mxu0 0.0
  %373 = vmatprep.subr.mxu0 0.0
  %374 = vmatpush1.msra.mxu0 0.0
  %375 = vmatprep.subr.mxu0 0.0
  %376 = vmatpush1.msra.mxu0 0.0
  %377 = vmatprep.subr.mxu0 0.0
  %378 = vmatpush1.msra.mxu0 0.0
  %379 = vmatprep.subr.mxu0 0.0
  %380 = vmatpush1.msra.mxu0 0.0
  %381 = vmatprep.subr.mxu0 0.0
  %382 = vmatpush1.msra.mxu0 0.0
  %383 = vmatprep.subr.mxu0 0.0
  %384 = vmatpush1.msra.mxu0 0.0
  %385 = vmatprep.subr.mxu0 0.0
  %386 = vmatpush1.msra.mxu0 0.0
  %387 = vmatprep.mubr.f32.mxu0 0.0
  %388 = vmatmul.mubr.f32.gmra.mrb[0].mxu0 %v321
  %v389 = vpop.f32.mrb[0].mxu0
  %v390 = vadd.f32 0.0, %v389
  %v391 = vpop.f32.mrb[0].mxu0
  %392 = vdwg.mxu0
  %v393 = vsel %vm48, %v390, 0.0
  %v394 = vrot.slane %v393, 4
  %v395 = vadd.f32 %v393, %v394
  %v396 = vrot.slane %v395, 2
  %v397 = vadd.f32 %v395, %v396
  %v398 = vrot.slane %v397, 1
  %v399 = vadd.f32 %v397, %v398
  %v400 = vmul.f32 %v399, 0.001953125
  %v401 = vld [vmem:[%s3] sm:$0x1]
  %v402 = vadd.f32 %v400, 0.01
  %v403 = vrsqrt.pop %v402
  %v404 = vmul.f32 %v401, %v403
  %v406 = vlaneseq
  %v407 = vshrl.u32 %v406, 7
  %v408 = vsub.s32 0, %v407
  %v409 = vrot.slane %v404, %v408
  %v411 = vmul.f32 %v309, %v409
  %v412 = vmul.f32 %v310, %v409
  %v413 = vmul.f32 %v311, %v409
  %v414 = vmul.f32 %v312, %v409
  %v415 = vld [vmem:[%s4] sm:$0x1]
  %v417 = vlaneseq
  %v418 = vshrl.u32 %v417, 7
  %v419 = vsub.s32 0, %v418
  %v420 = vrot.slane %v415, %v419
  %v422 = vadd.f32 %v411, %v420
  %v423 = vadd.f32 %v412, %v420
  %v424 = vadd.f32 %v413, %v420
  %v425 = vadd.f32 %v414, %v420
  %s426 = sld [smem:[#allocation3]]
  %vm427 = vcmp.gt.f32.partialorder %v422, 0.0
  %vm428 = vcmp.gt.f32.partialorder %v423, 0.0
  %vm429 = vcmp.gt.f32.partialorder %v424, 0.0
  %vm430 = vcmp.gt.f32.partialorder %v425, 0.0
  %v431 = vstv %s426
  %v432 = vmul.f32 %v431, %v422
  %v433 = vmul.f32 %v431, %v423
  %v434 = vmul.f32 %v431, %v424
  %v435 = vmul.f32 %v431, %v425
  %v436 = vsel %vm427, %v422, %v432
  %v437 = vsel %vm428, %v423, %v433
  %v438 = vsel %vm429, %v424, %v434
  %v439 = vsel %vm430, %v425, %v435
  %440 = vst.msk [vmem:[%s6] sm:$0xff] %vm48, %v436
  %441 = vst.msk [vmem:[%s6 + $0x8] sm:$0xff] %vm48, %v437
  %442 = vst.msk [vmem:[%s6 + $0x10] sm:$0xff] %vm48, %v438
  %443 = vst.msk [vmem:[%s6 + $0x18] sm:$0xff] %vm48, %v439
  // Predicated region
  $region26: #{forward.1} parent=0 // pred_check
    _
  $region27: #{forward.1} parent=0 // pred_check_branch
    %445 = sbr.rel (0) target = $region29
  $region28: #{forward.1} parent=0 // pred_region
    _
  $region29: #{forward.1} parent=0 // pred_fallthru
    _
  // Predicated region
  $region30: #{forward.1} parent=0 // pred_check
    _
  $region31: #{forward.1} parent=0 // pred_check_branch
    %447 = sbr.rel (0) target = $region33
  $region32: #{forward.1} parent=0 // pred_region
    _
  $region33: #{forward.1} parent=0 // pred_fallthru
    _

</llo_original>
